<compile_context>
chip_gen: v6e
topology: v6e:2x2x1
jax: 0.10.0
libtpu: 0.0.40
codegen_flags: <defaults>
</compile_context>

<pallas_src>
import functools

import jax
import jax.numpy as jnp
from jax.experimental import pallas as pl
from jax.experimental.pallas import tpu as pltpu


_LANE = 128
_DEFAULT_HW_CAP = 16384                 # max lane width of a block when tiling H*W
_MAX_TILE_NC = 16384                    # cap on rows per block
_VMEM_ROWS_BUDGET = 32 * 1024 * 1024    # VMEM budget used to bound rows per block
_VMEM_LIMIT = 48 * 1024 * 1024          # explicit scoped-VMEM limit (v5e default is 16 MiB)


def _round_down(x, m):
    return (x // m) * m


def _round_up(x, m):
    return -(-x // m) * m


def _chip_config():
    """(target HBM bytes per grid step per input buffer, TensorCores per chip).

    Falls back to conservative v5e-style settings if the device kind can't be
    identified, so this never breaks off-TPU tracing or unknown parts.
    """
    kind = ""
    try:
        kind = jax.devices()[0].device_kind.lower()
    except Exception:
        pass
    if "v7" in kind:
        # ~3.2 TB/s per TC: a 4 MiB block is only ~1.3us of DMA, so use bigger
        # blocks; 2 TensorCores per chip -> force >=2 tiles on the parallel axis.
        return 10 * 1024 * 1024, 2
    if "v6" in kind:
        return 8 * 1024 * 1024, 1
    if "v4" in kind or "v5p" in kind:
        return 4 * 1024 * 1024, 2
    return 4 * 1024 * 1024, 1           # v5e / unknown


def _gap_kernel(x_ref, o_ref, acc_ref, *, inv_hw, hw, tile_hw, needs_mask):
    """Row-sum one (tile_nc, tile_hw) block into a resident f32 accumulator;
    on the last H*W grid step divide by the full H*W and store."""
    j = pl.program_id(1)                 # reduction (H*W) axis -- last grid axis
    last = pl.num_programs(1) - 1

    @pl.when(j == 0)
    def _init():
        acc_ref[...] = jnp.zeros_like(acc_ref)

    if needs_mask:
        # Only the FINAL H*W block can run past the true H*W; keep every other
        # step on the mask-free fast path (pure cast + row-sum).
        @pl.when(j < last)
        def _body():
            x = x_ref[...].astype(jnp.float32)
            acc_ref[...] += jnp.sum(x, axis=-1, keepdims=True)

        @pl.when(j == last)
        def _tail():
            x = x_ref[...].astype(jnp.float32)
            # (1, tile_hw) lane mask broadcast over rows; padded lanes -> 0.
            col = j * tile_hw + jax.lax.broadcasted_iota(jnp.int32, (1, tile_hw), 1)
            x = jnp.where(col < hw, x, 0.0)
            acc_ref[...] += jnp.sum(x, axis=-1, keepdims=True)
    else:
        x = x_ref[...].astype(jnp.float32)
        acc_ref[...] += jnp.sum(x, axis=-1, keepdims=True)

    @pl.when(j == last)
    def _finalize():
        # Divide by the FULL H*W (closure constant), not the tile width.
        o_ref[...] = (acc_ref[...] * inv_hw).astype(o_ref.dtype)


def global_avg_pool2d(x, *, target_tile_bytes=None, hw_cap=_DEFAULT_HW_CAP):
    """x: (N, C, H, W) -> (N, C, 1, 1), mean over the spatial dims."""
    n, c, h, w = x.shape
    nc, hw = n * c, h * w
    itemsize = jnp.dtype(x.dtype).itemsize
    sub = max(8, 32 // itemsize)          # sublane multiple: 8 f32 / 16 bf16 / 32 int8

    chip_tile_bytes, n_tc = _chip_config()
    if target_tile_bytes is None:
        target_tile_bytes = chip_tile_bytes

    x2d = x.reshape(nc, hw)               # layout glue only, no compute

    # ---- reduction-axis (lane) tile -----------------------------------------
    if hw <= hw_cap:
        tile_hw, grid_hw, needs_mask = hw, 1, False    # full-dim block
    else:
        # Prefer the largest multiple-of-128 divisor of hw that keeps the same
        # number of grid steps as the cap would: no tail mask, no partial block
        # (covers 224^2, 112^2-style spatials).  Otherwise fall back to the cap
        # with a last-step mask.
        steps_at_cap = pl.cdiv(hw, hw_cap)
        tile_hw, needs_mask = hw_cap, (hw % hw_cap) != 0
        k = hw_cap // _LANE
        while k >= 1:
            cand = k * _LANE
            if hw % cand == 0:
                if hw // cand == steps_at_cap:
                    tile_hw, needs_mask = cand, False
                break
            k -= 1
        grid_hw = pl.cdiv(hw, tile_hw)

    # ---- row-axis (sublane) tile ---------------------------------------------
    # Budget rows by (a) the REAL HBM payload per grid step (tile_hw bytes per
    # row, not the lane-padded width -- matters for 7x7 / 14x14 CNN heads) and
    # (b) total VMEM: double-buffered lane-padded input tile + f32 scratch +
    # double-buffered output column (each column lane-padded to 128).
    lane_padded = _round_up(tile_hw, _LANE)
    per_row_hbm = tile_hw * itemsize
    per_row_vmem = 2 * lane_padded * itemsize + 3 * _LANE * 4
    rows_hbm = max(1, target_tile_bytes // per_row_hbm)
    rows_vmem = max(1, _VMEM_ROWS_BUDGET // per_row_vmem)
    rows_budget = min(rows_hbm, rows_vmem, _MAX_TILE_NC)
    rows_budget = max(sub, _round_down(rows_budget, sub))

    if nc <= rows_budget:
        if n_tc >= 2 and nc >= 2 * sub:
            # Multi-TensorCore chip: split the "parallel" NC axis so both cores
            # stream (grid_nc == 1 would leave ~half the chip's HBM BW idle).
            tile_nc = _round_up(pl.cdiv(nc, n_tc), sub)
            grid_nc = pl.cdiv(nc, tile_nc)
        else:
            tile_nc, grid_nc = nc, 1              # single full-dim block
    else:
        tile_nc = rows_budget                     # multiple of `sub`
        grid_nc = pl.cdiv(nc, tile_nc)            # partial last block: OOB rows masked at store

    kernel = functools.partial(
        _gap_kernel, inv_hw=1.0 / hw, hw=hw, tile_hw=tile_hw, needs_mask=needs_mask)

    cost = pl.CostEstimate(
        flops=nc * hw,                            # the adds of the reduction
        transcendentals=0,
        bytes_accessed=nc * hw * itemsize + nc * itemsize)

    out2d = pl.pallas_call(
        kernel,
        out_shape=jax.ShapeDtypeStruct((nc, 1), x.dtype),
        grid=(grid_nc, grid_hw),                  # reduction axis last
        in_specs=[pl.BlockSpec((tile_nc, tile_hw), lambda i, j: (i, j))],
        out_specs=pl.BlockSpec((tile_nc, 1), lambda i, j: (i, 0)),
        scratch_shapes=[pltpu.VMEM((tile_nc, 1), jnp.float32)],
        compiler_params=pltpu.CompilerParams(
            dimension_semantics=("parallel", "arbitrary"),
            # Actual usage is <~40 MiB by construction; explicit limit keeps
            # headroom on v5e (16 MiB scoped default) and fits v7x's 64 MiB.
            vmem_limit_bytes=_VMEM_LIMIT,
        ),
        cost_estimate=cost,
    )(x2d)

    return out2d.reshape(n, c, 1, 1)


if __name__ == "__main__":
    key = jax.random.PRNGKey(0)

    # 1) Small NCHW input consistent with the module's forward (single block).
    x = jax.random.normal(key, (2, 4, 16, 16), dtype=jnp.float32)
    out = jax.block_until_ready(global_avg_pool2d(x))
    ref = jnp.mean(x, axis=(2, 3), keepdims=True)
    assert out.shape == (2, 4, 1, 1), out.shape
    assert jnp.allclose(out, ref, atol=1e-5, rtol=1e-5), "mismatch vs reference"

    # 2) H*W <= cap but NOT a multiple of 128: full-dim lane block with lane
    #    padding, no mask (the previously untested path).
    x1 = jax.random.normal(jax.random.PRNGKey(0), (2, 8, 13, 13), dtype=jnp.float32)
    out1 = jax.block_until_ready(global_avg_pool2d(x1))
    ref1 = jnp.mean(x1, axis=(2, 3), keepdims=True)
    assert out1.shape == (2, 8, 1, 1), out1.shape
    assert jnp.allclose(out1, ref1, atol=1e-5, rtol=1e-5), "mismatch vs reference (13x13)"

    # 3) Tiny tile caps to exercise the multi-tile path: several NC tiles
    #    (incl. a partial last one) and a tiled + tail-masked H*W reduction.
    x2 = jax.random.normal(jax.random.PRNGKey(0), (2, 130, 13, 13), dtype=jnp.float32)
    out2 = jax.block_until_ready(
        global_avg_pool2d(x2, target_tile_bytes=64 * 1024, hw_cap=128))
    ref2 = jnp.mean(x2, axis=(2, 3), keepdims=True)
    assert out2.shape == (2, 130, 1, 1), out2.shape
    assert jnp.allclose(out2, ref2, atol=1e-5, rtol=1e-5), "mismatch vs reference (tiled)"

    # 4) bf16 streaming path (native-dtype DMA, f32 accumulation in-kernel).
    xb = jax.random.normal(jax.random.PRNGKey(0), (2, 8, 14, 14), dtype=jnp.bfloat16)
    outb = jax.block_until_ready(global_avg_pool2d(xb))
    refb = jnp.mean(xb.astype(jnp.float32), axis=(2, 3), keepdims=True)
    assert outb.shape == (2, 8, 1, 1), outb.shape
    assert jnp.allclose(outb.astype(jnp.float32), refb, atol=1e-2, rtol=1e-2), \
        "mismatch vs reference (bf16)"

    print("KERNEL_OK")
</pallas_src>

<mosaic_0001>
module attributes {stable_mosaic.version = 11 : i64} {
  func.func @_gap_kernel(%arg0: i32, %arg1: i32, %arg2: memref<8x256xf32, #tpu.memory_space<vmem>>, %arg3: memref<8x1xf32, #tpu.memory_space<vmem>>, %arg4: memref<8x1xf32, #tpu.memory_space<vmem>>) attributes {dimension_semantics = [#tpu.dimension_semantics<parallel>, #tpu.dimension_semantics<arbitrary>], iteration_bounds = array<i64: 1, 1>, scalar_prefetch = 0 : i64, scratch_operands = 1 : i64, tpu.core_type = #tpu.core_type<tc>, window_params = [{transform_indices = @transform_0, window_bounds = array<i64: 8, 256>}, {transform_indices = @transform_1, window_bounds = array<i64: 8, 1>}]} {
    %c0_i32 = arith.constant 0 : i32
    %0 = arith.cmpi eq, %arg1, %c0_i32 : i32
    %1 = arith.extui %0 : i1 to i32
    %c0_i32_0 = arith.constant 0 : i32
    %2 = arith.cmpi ne, %1, %c0_i32_0 : i32
    scf.if %2 {
      %cst_8 = arith.constant 0.000000e+00 : f32
      %12 = vector.broadcast %cst_8 : f32 to vector<8x1xf32>
      %c0_9 = arith.constant 0 : index
      %c0_10 = arith.constant 0 : index
      %13 = vector.load %arg4[%c0_9, %c0_10] : memref<8x1xf32, #tpu.memory_space<vmem>>, vector<8x1xf32>
      tpu.vector_store %arg4[%c0_9, %c0_10], %12 {strides = array<i32>} : memref<8x1xf32, #tpu.memory_space<vmem>>, vector<8x1xf32>,
    } else {
    }
    %c0 = arith.constant 0 : index
    %c0_1 = arith.constant 0 : index
    %3 = vector.load %arg2[%c0, %c0_1] : memref<8x256xf32, #tpu.memory_space<vmem>>, vector<8x256xf32>
    %c0_2 = arith.constant 0 : index
    %c0_3 = arith.constant 0 : index
    %4 = vector.load %arg4[%c0_2, %c0_3] : memref<8x1xf32, #tpu.memory_space<vmem>>, vector<8x1xf32>
    %cst = arith.constant dense<0.000000e+00> : vector<8xf32>
    %5 = vector.multi_reduction <add>, %3, %cst [1] : vector<8x256xf32> to vector<8xf32>
    %6 = vector.shape_cast %5 : vector<8xf32> to vector<8x1xf32>
    %7 = arith.addf %4, %6 : vector<8x1xf32>
    %c0_4 = arith.constant 0 : index
    %c0_5 = arith.constant 0 : index
    %8 = vector.load %arg4[%c0_4, %c0_5] : memref<8x1xf32, #tpu.memory_space<vmem>>, vector<8x1xf32>
    tpu.vector_store %arg4[%c0_4, %c0_5], %7 {strides = array<i32>} : memref<8x1xf32, #tpu.memory_space<vmem>>, vector<8x1xf32>,
    %c0_i32_6 = arith.constant 0 : i32
    %9 = arith.cmpi eq, %arg1, %c0_i32_6 : i32
    %10 = arith.extui %9 : i1 to i32
    %c0_i32_7 = arith.constant 0 : i32
    %11 = arith.cmpi ne, %10, %c0_i32_7 : i32
    scf.if %11 {
      %c0_8 = arith.constant 0 : index
      %c0_9 = arith.constant 0 : index
      %12 = vector.load %arg4[%c0_8, %c0_9] : memref<8x1xf32, #tpu.memory_space<vmem>>, vector<8x1xf32>
      %cst_10 = arith.constant 3.906250e-03 : f32
      %13 = vector.broadcast %cst_10 : f32 to vector<8x1xf32>
      %14 = arith.mulf %12, %13 : vector<8x1xf32>
      %c0_11 = arith.constant 0 : index
      %c0_12 = arith.constant 0 : index
      %15 = vector.load %arg3[%c0_11, %c0_12] : memref<8x1xf32, #tpu.memory_space<vmem>>, vector<8x1xf32>
      tpu.vector_store %arg3[%c0_11, %c0_12], %14 {strides = array<i32>} : memref<8x1xf32, #tpu.memory_space<vmem>>, vector<8x1xf32>,
    } else {
    }
    return
  }
  func.func @transform_0(%arg0: i32, %arg1: i32) -> (i32, i32) {
    %c0_i32 = arith.constant 0 : i32
    return %arg0, %arg1 : i32, i32
  }
  func.func @transform_1(%arg0: i32, %arg1: i32) -> (i32, i32) {
    %c0_i32 = arith.constant 0 : i32
    %c0_i32_0 = arith.constant 0 : i32
    return %arg0, %c0_i32 : i32, i32
  }
}

</mosaic_0001>

<llo_original>
// kernel: tpu_custom_call.1
$region0: #{tpu_custom_call.1}
  #allocation0 [shape = 'u32[]', space=smem, size = 0x4, offset = 0x4, fixed_abs, tag = 'smem constant byte address 0x4 - core index']
  #allocation1 [shape = 'u32[144,128]{1,0:T(1,128)}', space=vmem, size = 0x12000, scoped, tag = 'internal scratch']
  #allocation2 [shape = 'f32[8,1]{1,0:T(8,128)}', space=vmem, size = 0x1000, scoped, tag = 'scratch operand']
  %s0 = inlined_call_operand.hbm [shape: f32[8,256], index: 0, kind: input, shape index: {}]
  %s1 = inlined_call_operand.vmem [shape: f32[8,1], index: 1, kind: output, shape index: {}]
  %s2 = sld [smem:[#allocation0]]
  $region26: #{tpu_custom_call.1} parent=0
    _
  %s4 = ssub.s32 1, %s2
  %s5 = scalar_select 0, %s4, %s2
  $region1: #{tpu_custom_call.1} parent=0
    #allocation3 [shape = 'u8[8192]{0}', space=vmem, size = 0x2000, scoped, tag = 'input window, operand 0, single buffered']
    #allocation4 [shape = 's32[1]{0}', space=sflag, size = 0x4, scoped, tag = 'scoped memory for tpu_custom_call.1']
    %6 = vsyncpa [#allocation4], 0
    // Predicated region
    $region2: #{tpu_custom_call.1} parent=1 // pred_check
      _
    $region3: #{tpu_custom_call.1} parent=1 // pred_check_branch
      %8 = sbr.rel (0) target = $region5
    $region4: #{tpu_custom_call.1} parent=1 // pred_region
      %s10 = ssub.s32 256, 256
      %11 = vsyncadd [#allocation4], %s10
      %s13 = sshll.u32 [#allocation3], 4
      %s14 = int_to_ptr.vmem [resolvable:$true] %s13
      %16 = dma.hbm_to_vmem [thread:$0]  %s0, 256, %s14, [#allocation4]
    $region5: #{tpu_custom_call.1} parent=1 // pred_fallthru
      _
    // Predicated region
    $region6: #{tpu_custom_call.1} parent=1 // pred_check
      _
    $region7: #{tpu_custom_call.1} parent=1 // pred_check_branch
      %18 = sbr.rel (0) target = $region9
    $region8: #{tpu_custom_call.1} parent=1 // pred_region
      %19 = dma.done [#allocation4], 256
    $region9: #{tpu_custom_call.1} parent=1 // pred_fallthru
      _
    %p20 = scmp.eq.s32.totalorder 0, 0
    // Predicated region
    $region10: #{tpu_custom_call.1} parent=1 // pred_check
      %p21 = pneg %p20
    $region11: #{tpu_custom_call.1} parent=1 // pred_check_branch
      %23 = sbr.rel (%p21) target = $region13
    $region12: #{tpu_custom_call.1} parent=1 // pred_region
      %vm24 = vcmask 7168
      %25 = vst.msk [vmem:[#allocation2] sm:$0xff] %vm24, 0.0
    $region13: #{tpu_custom_call.1} parent=1 // pred_fallthru
      _
    %v26 = vld [vmem:[#allocation3] sm:$0xff]
    %v27 = vld [vmem:[#allocation3 + $0x8] sm:$0xff]
    %v28 = vld [vmem:[#allocation2] sm:$0xff]
    %v29 = vadd.f32 %v26, %v27
    %30 = vadd.xlane.f32.xlu0 %v29
    %v31 = vpop.xlane.xlu0 %30
    %v32 = vadd.f32 %v28, %v31
    %vm33 = vcmask 7168
    %34 = vst.msk [vmem:[#allocation2] sm:$0xff] %vm33, %v32
    // Predicated region
    $region14: #{tpu_custom_call.1} parent=1 // pred_check
      %p35 = pneg %p20
    $region15: #{tpu_custom_call.1} parent=1 // pred_check_branch
      %37 = sbr.rel (%p35) target = $region17
    $region16: #{tpu_custom_call.1} parent=1 // pred_region
      %v38 = vld [vmem:[#allocation2] sm:$0xff]
      %v39 = vmul.f32 %v38, 0.00390625
      %40 = vst.msk [vmem:[%s1] sm:$0xff] %vm33, %v39
    $region17: #{tpu_custom_call.1} parent=1 // pred_fallthru
      _
    // Predicated region
    $region18: #{tpu_custom_call.1} parent=1 // pred_check
      _
    $region19: #{tpu_custom_call.1} parent=1 // pred_check_branch
      %42 = sbr.rel (0) target = $region21
    $region20: #{tpu_custom_call.1} parent=1 // pred_region
      _
    $region21: #{tpu_custom_call.1} parent=1 // pred_fallthru
      _
    // Predicated region
    $region22: #{tpu_custom_call.1} parent=1 // pred_check
      _
    $region23: #{tpu_custom_call.1} parent=1 // pred_check_branch
      %44 = sbr.rel (0) target = $region25
    $region24: #{tpu_custom_call.1} parent=1 // pred_region
      _
    $region25: #{tpu_custom_call.1} parent=1 // pred_fallthru
      _
    %45 = vsyncpa [#allocation4], 1

</llo_original>
